<compile_context>
chip_gen: v7x
topology: tpu7x:2x2x1
jax: 0.10.0
libtpu: 0.0.40
codegen_flags: <defaults>
</compile_context>

<pallas_src>
import functools

import jax
import jax.numpy as jnp
from jax import lax
from jax.experimental import pallas as pl
from jax.experimental.pallas import tpu as pltpu


def _round_up(x: int, m: int) -> int:
    return ((x + m - 1) // m) * m


def _neg_pearson_kernel(preds_ref, labels_ref, out_ref,
                        sx_ref, sy_ref, sxy_ref, sx2_ref, sy2_ref,
                        *, n_total: int):
    k = pl.program_id(1)

    @pl.when(k == 0)
    def _init():
        sx_ref[...] = jnp.zeros_like(sx_ref)
        sy_ref[...] = jnp.zeros_like(sy_ref)
        sxy_ref[...] = jnp.zeros_like(sxy_ref)
        sx2_ref[...] = jnp.zeros_like(sx2_ref)
        sy2_ref[...] = jnp.zeros_like(sy2_ref)

    x = preds_ref[...].astype(jnp.float32)   # (TB, TN)
    y = labels_ref[...].astype(jnp.float32)  # (TB, TN)

    # Per-row partial reductions for this N-tile, accumulated into VMEM
    # scratch.  Zero-padded N columns contribute nothing to any of the sums.
    sx_ref[...] += jnp.sum(x, axis=1, keepdims=True)
    sy_ref[...] += jnp.sum(y, axis=1, keepdims=True)
    sxy_ref[...] += jnp.sum(x * y, axis=1, keepdims=True)
    sx2_ref[...] += jnp.sum(x * x, axis=1, keepdims=True)
    sy2_ref[...] += jnp.sum(y * y, axis=1, keepdims=True)

    @pl.when(k == pl.num_programs(1) - 1)
    def _finalize():
        n_f = jnp.float32(n_total)
        sx = sx_ref[...]
        sy = sy_ref[...]
        num = n_f * sxy_ref[...] - sx * sy
        den_sq = (n_f * sx2_ref[...] - sx * sx) * (n_f * sy2_ref[...] - sy * sy)
        # rsqrt runs on the EUP (its own VLIW slot) instead of a VPU divide.
        pearson = num * lax.rsqrt(den_sq)
        out_ref[...] = 1.0 - pearson          # (TB, 1) per-row loss terms


def neg_pearson_loss(preds, labels, *, tb: int = 128, tn: int = 1024):
    """Negative-Pearson loss, matching the PyTorch Neg_Pearson.forward()."""
    assert preds.shape == labels.shape and preds.ndim == 2
    B, N = preds.shape

    # Tile sizes: TB multiple of 8, TN multiple of 128 (lane-dense), clipped
    # to the (rounded-up) array extents so small problems use a single tile.
    TB = min(_round_up(max(tb, 8), 8), _round_up(B, 8))
    TN = min(_round_up(max(tn, 128), 128), _round_up(N, 128))
    B_pad = _round_up(B, TB)
    N_pad = _round_up(N, TN)

    # Zero padding along N is exact (adds nothing to any sum; the Pearson
    # formula uses the original N).  Padded batch rows produce NaNs that are
    # sliced off before the final mean.
    if (B_pad != B) or (N_pad != N):
        preds = jnp.pad(preds, ((0, B_pad - B), (0, N_pad - N)))
        labels = jnp.pad(labels, ((0, B_pad - B), (0, N_pad - N)))

    grid = (B_pad // TB, N_pad // TN)

    per_row = pl.pallas_call(
        functools.partial(_neg_pearson_kernel, n_total=N),
        out_shape=jax.ShapeDtypeStruct((B_pad, 1), jnp.float32),
        grid_spec=pltpu.PrefetchScalarGridSpec(
            num_scalar_prefetch=0,
            grid=grid,
            in_specs=[
                pl.BlockSpec((TB, TN), lambda i, k: (i, k)),
                pl.BlockSpec((TB, TN), lambda i, k: (i, k)),
            ],
            out_specs=pl.BlockSpec((TB, 1), lambda i, k: (i, 0)),
            scratch_shapes=[pltpu.VMEM((TB, 1), jnp.float32)] * 5,
        ),
        compiler_params=pltpu.CompilerParams(
            dimension_semantics=("parallel", "arbitrary")),
    )(preds, labels)

    # loss = sum_i (1 - pearson_i) / B   (identical to the PyTorch loop)
    return jnp.sum(per_row[:B, 0]) / B


def _reference_neg_pearson(preds, labels):
    # Pure-JAX reference mirroring the PyTorch loop.
    B, N = preds.shape
    loss = 0.0
    for i in range(B):
        x = preds[i].astype(jnp.float32)
        y = labels[i].astype(jnp.float32)
        sum_x = jnp.sum(x)
        sum_y = jnp.sum(y)
        sum_xy = jnp.sum(x * y)
        sum_x2 = jnp.sum(x * x)
        sum_y2 = jnp.sum(y * y)
        pearson = (N * sum_xy - sum_x * sum_y) / jnp.sqrt(
            (N * sum_x2 - sum_x ** 2) * (N * sum_y2 - sum_y ** 2))
        loss += 1.0 - pearson
    return loss / B


if __name__ == "__main__":
    key = jax.random.PRNGKey(0)
    k1, k2, k3, k4 = jax.random.split(key, 4)

    # Aligned shapes; small tiles force a (2, 4) grid so both the B-parallel
    # axis and the N accumulation axis are exercised.
    B, N = 16, 1024
    preds = jax.random.normal(k1, (B, N), dtype=jnp.float32)
    labels = jax.random.normal(k2, (B, N), dtype=jnp.float32)

    loss = neg_pearson_loss(preds, labels, tb=8, tn=256)
    jax.block_until_ready(loss)
    ref = _reference_neg_pearson(preds, labels)
    assert jnp.allclose(loss, ref, atol=1e-5, rtol=1e-5), (loss, ref)

    # Non-aligned shapes exercise the padding path with default tiles.
    B2, N2 = 5, 300
    preds2 = jax.random.normal(k3, (B2, N2), dtype=jnp.float32)
    labels2 = jax.random.normal(k4, (B2, N2), dtype=jnp.float32)
    loss2 = neg_pearson_loss(preds2, labels2)
    jax.block_until_ready(loss2)
    ref2 = _reference_neg_pearson(preds2, labels2)
    assert jnp.allclose(loss2, ref2, atol=1e-5, rtol=1e-5), (loss2, ref2)

    print("KERNEL_OK")
</pallas_src>

<mosaic_0001>
module attributes {stable_mosaic.version = 11 : i64} {
  func.func @_neg_pearson_kernel(%arg0: i32, %arg1: i32, %arg2: memref<8x256xf32, #tpu.memory_space<vmem>>, %arg3: memref<8x256xf32, #tpu.memory_space<vmem>>, %arg4: memref<8x1xf32, #tpu.memory_space<vmem>>, %arg5: memref<8x1xf32, #tpu.memory_space<vmem>>, %arg6: memref<8x1xf32, #tpu.memory_space<vmem>>, %arg7: memref<8x1xf32, #tpu.memory_space<vmem>>, %arg8: memref<8x1xf32, #tpu.memory_space<vmem>>, %arg9: memref<8x1xf32, #tpu.memory_space<vmem>>) attributes {dimension_semantics = [#tpu.dimension_semantics<parallel>, #tpu.dimension_semantics<arbitrary>], iteration_bounds = array<i64: 2, 4>, scalar_prefetch = 0 : i64, scratch_operands = 5 : i64, tpu.core_type = #tpu.core_type<tc>, window_params = [{transform_indices = @transform_0, window_bounds = array<i64: 8, 256>}, {transform_indices = @transform_1, window_bounds = array<i64: 8, 256>}, {transform_indices = @transform_2, window_bounds = array<i64: 8, 1>}]} {
    %c0_i32 = arith.constant 0 : i32
    %0 = arith.cmpi eq, %arg1, %c0_i32 : i32
    %1 = arith.extui %0 : i1 to i32
    %c0_i32_0 = arith.constant 0 : i32
    %2 = arith.cmpi ne, %1, %c0_i32_0 : i32
    scf.if %2 {
      %cst_29 = arith.constant 0.000000e+00 : f32
      %36 = vector.broadcast %cst_29 : f32 to vector<8x1xf32>
      %c0_30 = arith.constant 0 : index
      %c0_31 = arith.constant 0 : index
      %37 = vector.load %arg5[%c0_30, %c0_31] : memref<8x1xf32, #tpu.memory_space<vmem>>, vector<8x1xf32>
      tpu.vector_store %arg5[%c0_30, %c0_31], %36 {strides = array<i32>} : memref<8x1xf32, #tpu.memory_space<vmem>>, vector<8x1xf32>,
      %cst_32 = arith.constant 0.000000e+00 : f32
      %38 = vector.broadcast %cst_32 : f32 to vector<8x1xf32>
      %c0_33 = arith.constant 0 : index
      %c0_34 = arith.constant 0 : index
      %39 = vector.load %arg6[%c0_33, %c0_34] : memref<8x1xf32, #tpu.memory_space<vmem>>, vector<8x1xf32>
      tpu.vector_store %arg6[%c0_33, %c0_34], %38 {strides = array<i32>} : memref<8x1xf32, #tpu.memory_space<vmem>>, vector<8x1xf32>,
      %cst_35 = arith.constant 0.000000e+00 : f32
      %40 = vector.broadcast %cst_35 : f32 to vector<8x1xf32>
      %c0_36 = arith.constant 0 : index
      %c0_37 = arith.constant 0 : index
      %41 = vector.load %arg7[%c0_36, %c0_37] : memref<8x1xf32, #tpu.memory_space<vmem>>, vector<8x1xf32>
      tpu.vector_store %arg7[%c0_36, %c0_37], %40 {strides = array<i32>} : memref<8x1xf32, #tpu.memory_space<vmem>>, vector<8x1xf32>,
      %cst_38 = arith.constant 0.000000e+00 : f32
      %42 = vector.broadcast %cst_38 : f32 to vector<8x1xf32>
      %c0_39 = arith.constant 0 : index
      %c0_40 = arith.constant 0 : index
      %43 = vector.load %arg8[%c0_39, %c0_40] : memref<8x1xf32, #tpu.memory_space<vmem>>, vector<8x1xf32>
      tpu.vector_store %arg8[%c0_39, %c0_40], %42 {strides = array<i32>} : memref<8x1xf32, #tpu.memory_space<vmem>>, vector<8x1xf32>,
      %cst_41 = arith.constant 0.000000e+00 : f32
      %44 = vector.broadcast %cst_41 : f32 to vector<8x1xf32>
      %c0_42 = arith.constant 0 : index
      %c0_43 = arith.constant 0 : index
      %45 = vector.load %arg9[%c0_42, %c0_43] : memref<8x1xf32, #tpu.memory_space<vmem>>, vector<8x1xf32>
      tpu.vector_store %arg9[%c0_42, %c0_43], %44 {strides = array<i32>} : memref<8x1xf32, #tpu.memory_space<vmem>>, vector<8x1xf32>,
    } else {
    }
    %c0 = arith.constant 0 : index
    %c0_1 = arith.constant 0 : index
    %3 = vector.load %arg2[%c0, %c0_1] : memref<8x256xf32, #tpu.memory_space<vmem>>, vector<8x256xf32>
    %c0_2 = arith.constant 0 : index
    %c0_3 = arith.constant 0 : index
    %4 = vector.load %arg3[%c0_2, %c0_3] : memref<8x256xf32, #tpu.memory_space<vmem>>, vector<8x256xf32>
    %c0_4 = arith.constant 0 : index
    %c0_5 = arith.constant 0 : index
    %5 = vector.load %arg5[%c0_4, %c0_5] : memref<8x1xf32, #tpu.memory_space<vmem>>, vector<8x1xf32>
    %cst = arith.constant dense<0.000000e+00> : vector<8xf32>
    %6 = vector.multi_reduction <add>, %3, %cst [1] : vector<8x256xf32> to vector<8xf32>
    %7 = vector.shape_cast %6 : vector<8xf32> to vector<8x1xf32>
    %8 = arith.addf %5, %7 : vector<8x1xf32>
    %c0_6 = arith.constant 0 : index
    %c0_7 = arith.constant 0 : index
    %9 = vector.load %arg5[%c0_6, %c0_7] : memref<8x1xf32, #tpu.memory_space<vmem>>, vector<8x1xf32>
    tpu.vector_store %arg5[%c0_6, %c0_7], %8 {strides = array<i32>} : memref<8x1xf32, #tpu.memory_space<vmem>>, vector<8x1xf32>,
    %c0_8 = arith.constant 0 : index
    %c0_9 = arith.constant 0 : index
    %10 = vector.load %arg6[%c0_8, %c0_9] : memref<8x1xf32, #tpu.memory_space<vmem>>, vector<8x1xf32>
    %cst_10 = arith.constant dense<0.000000e+00> : vector<8xf32>
    %11 = vector.multi_reduction <add>, %4, %cst_10 [1] : vector<8x256xf32> to vector<8xf32>
    %12 = vector.shape_cast %11 : vector<8xf32> to vector<8x1xf32>
    %13 = arith.addf %10, %12 : vector<8x1xf32>
    %c0_11 = arith.constant 0 : index
    %c0_12 = arith.constant 0 : index
    %14 = vector.load %arg6[%c0_11, %c0_12] : memref<8x1xf32, #tpu.memory_space<vmem>>, vector<8x1xf32>
    tpu.vector_store %arg6[%c0_11, %c0_12], %13 {strides = array<i32>} : memref<8x1xf32, #tpu.memory_space<vmem>>, vector<8x1xf32>,
    %c0_13 = arith.constant 0 : index
    %c0_14 = arith.constant 0 : index
    %15 = vector.load %arg7[%c0_13, %c0_14] : memref<8x1xf32, #tpu.memory_space<vmem>>, vector<8x1xf32>
    %16 = arith.mulf %3, %4 : vector<8x256xf32>
    %cst_15 = arith.constant dense<0.000000e+00> : vector<8xf32>
    %17 = vector.multi_reduction <add>, %16, %cst_15 [1] : vector<8x256xf32> to vector<8xf32>
    %18 = vector.shape_cast %17 : vector<8xf32> to vector<8x1xf32>
    %19 = arith.addf %15, %18 : vector<8x1xf32>
    %c0_16 = arith.constant 0 : index
    %c0_17 = arith.constant 0 : index
    %20 = vector.load %arg7[%c0_16, %c0_17] : memref<8x1xf32, #tpu.memory_space<vmem>>, vector<8x1xf32>
    tpu.vector_store %arg7[%c0_16, %c0_17], %19 {strides = array<i32>} : memref<8x1xf32, #tpu.memory_space<vmem>>, vector<8x1xf32>,
    %c0_18 = arith.constant 0 : index
    %c0_19 = arith.constant 0 : index
    %21 = vector.load %arg8[%c0_18, %c0_19] : memref<8x1xf32, #tpu.memory_space<vmem>>, vector<8x1xf32>
    %22 = arith.mulf %3, %3 : vector<8x256xf32>
    %cst_20 = arith.constant dense<0.000000e+00> : vector<8xf32>
    %23 = vector.multi_reduction <add>, %22, %cst_20 [1] : vector<8x256xf32> to vector<8xf32>
    %24 = vector.shape_cast %23 : vector<8xf32> to vector<8x1xf32>
    %25 = arith.addf %21, %24 : vector<8x1xf32>
    %c0_21 = arith.constant 0 : index
    %c0_22 = arith.constant 0 : index
    %26 = vector.load %arg8[%c0_21, %c0_22] : memref<8x1xf32, #tpu.memory_space<vmem>>, vector<8x1xf32>
    tpu.vector_store %arg8[%c0_21, %c0_22], %25 {strides = array<i32>} : memref<8x1xf32, #tpu.memory_space<vmem>>, vector<8x1xf32>,
    %c0_23 = arith.constant 0 : index
    %c0_24 = arith.constant 0 : index
    %27 = vector.load %arg9[%c0_23, %c0_24] : memref<8x1xf32, #tpu.memory_space<vmem>>, vector<8x1xf32>
    %28 = arith.mulf %4, %4 : vector<8x256xf32>
    %cst_25 = arith.constant dense<0.000000e+00> : vector<8xf32>
    %29 = vector.multi_reduction <add>, %28, %cst_25 [1] : vector<8x256xf32> to vector<8xf32>
    %30 = vector.shape_cast %29 : vector<8xf32> to vector<8x1xf32>
    %31 = arith.addf %27, %30 : vector<8x1xf32>
    %c0_26 = arith.constant 0 : index
    %c0_27 = arith.constant 0 : index
    %32 = vector.load %arg9[%c0_26, %c0_27] : memref<8x1xf32, #tpu.memory_space<vmem>>, vector<8x1xf32>
    tpu.vector_store %arg9[%c0_26, %c0_27], %31 {strides = array<i32>} : memref<8x1xf32, #tpu.memory_space<vmem>>, vector<8x1xf32>,
    %c3_i32 = arith.constant 3 : i32
    %33 = arith.cmpi eq, %arg1, %c3_i32 : i32
    %34 = arith.extui %33 : i1 to i32
    %c0_i32_28 = arith.constant 0 : i32
    %35 = arith.cmpi ne, %34, %c0_i32_28 : i32
    scf.if %35 {
      %c0_29 = arith.constant 0 : index
      %c0_30 = arith.constant 0 : index
      %36 = vector.load %arg5[%c0_29, %c0_30] : memref<8x1xf32, #tpu.memory_space<vmem>>, vector<8x1xf32>
      %c0_31 = arith.constant 0 : index
      %c0_32 = arith.constant 0 : index
      %37 = vector.load %arg6[%c0_31, %c0_32] : memref<8x1xf32, #tpu.memory_space<vmem>>, vector<8x1xf32>
      %c0_33 = arith.constant 0 : index
      %c0_34 = arith.constant 0 : index
      %38 = vector.load %arg7[%c0_33, %c0_34] : memref<8x1xf32, #tpu.memory_space<vmem>>, vector<8x1xf32>
      %cst_35 = arith.constant 1.024000e+03 : f32
      %39 = vector.broadcast %cst_35 : f32 to vector<8x1xf32>
      %40 = arith.mulf %39, %38 : vector<8x1xf32>
      %41 = arith.mulf %36, %37 : vector<8x1xf32>
      %42 = arith.subf %40, %41 : vector<8x1xf32>
      %c0_36 = arith.constant 0 : index
      %c0_37 = arith.constant 0 : index
      %43 = vector.load %arg8[%c0_36, %c0_37] : memref<8x1xf32, #tpu.memory_space<vmem>>, vector<8x1xf32>
      %cst_38 = arith.constant 1.024000e+03 : f32
      %44 = vector.broadcast %cst_38 : f32 to vector<8x1xf32>
      %45 = arith.mulf %44, %43 : vector<8x1xf32>
      %46 = arith.mulf %36, %36 : vector<8x1xf32>
      %47 = arith.subf %45, %46 : vector<8x1xf32>
      %c0_39 = arith.constant 0 : index
      %c0_40 = arith.constant 0 : index
      %48 = vector.load %arg9[%c0_39, %c0_40] : memref<8x1xf32, #tpu.memory_space<vmem>>, vector<8x1xf32>
      %cst_41 = arith.constant 1.024000e+03 : f32
      %49 = vector.broadcast %cst_41 : f32 to vector<8x1xf32>
      %50 = arith.mulf %49, %48 : vector<8x1xf32>
      %51 = arith.mulf %37, %37 : vector<8x1xf32>
      %52 = arith.subf %50, %51 : vector<8x1xf32>
      %53 = arith.mulf %47, %52 : vector<8x1xf32>
      %54 = math.rsqrt %53 : vector<8x1xf32>
      %55 = arith.mulf %42, %54 : vector<8x1xf32>
      %cst_42 = arith.constant 1.000000e+00 : f32
      %56 = vector.broadcast %cst_42 : f32 to vector<8x1xf32>
      %57 = arith.subf %56, %55 : vector<8x1xf32>
      %c0_43 = arith.constant 0 : index
      %c0_44 = arith.constant 0 : index
      %58 = vector.load %arg4[%c0_43, %c0_44] : memref<8x1xf32, #tpu.memory_space<vmem>>, vector<8x1xf32>
      tpu.vector_store %arg4[%c0_43, %c0_44], %57 {strides = array<i32>} : memref<8x1xf32, #tpu.memory_space<vmem>>, vector<8x1xf32>,
    } else {
    }
    return
  }
  func.func @transform_0(%arg0: i32, %arg1: i32) -> (i32, i32) {
    %c0_i32 = arith.constant 0 : i32
    return %arg0, %arg1 : i32, i32
  }
  func.func @transform_1(%arg0: i32, %arg1: i32) -> (i32, i32) {
    %c0_i32 = arith.constant 0 : i32
    return %arg0, %arg1 : i32, i32
  }
  func.func @transform_2(%arg0: i32, %arg1: i32) -> (i32, i32) {
    %c0_i32 = arith.constant 0 : i32
    %c0_i32_0 = arith.constant 0 : i32
    return %arg0, %c0_i32 : i32, i32
  }
}

</mosaic_0001>

<llo_original>
// kernel: tpu_custom_call.1
$region0: #{tpu_custom_call.1}
  #allocation0 [shape = 'u32[]', space=smem, size = 0x4, offset = 0x4, fixed_abs, tag = 'smem constant byte address 0x4 - core index']
  #allocation1 [shape = 'u32[144,128]{1,0:T(1,128)}', space=vmem, size = 0x12000, scoped, tag = 'internal scratch']
  #allocation2 [shape = 'f32[8,1]{1,0:T(8,128)}', space=vmem, size = 0x1000, scoped, tag = 'scratch operand']
  #allocation3 [shape = 'f32[8,1]{1,0:T(8,128)}', space=vmem, size = 0x1000, scoped, tag = 'scratch operand']
  #allocation4 [shape = 'f32[8,1]{1,0:T(8,128)}', space=vmem, size = 0x1000, scoped, tag = 'scratch operand']
  #allocation5 [shape = 'f32[8,1]{1,0:T(8,128)}', space=vmem, size = 0x1000, scoped, tag = 'scratch operand']
  #allocation6 [shape = 'f32[8,1]{1,0:T(8,128)}', space=vmem, size = 0x1000, scoped, tag = 'scratch operand']
  %s0 = inlined_call_operand.hbm [shape: f32[16,1024], index: 0, kind: input, shape index: {}]
  %s1 = inlined_call_operand.hbm [shape: f32[16,1024], index: 1, kind: input, shape index: {}]
  %s2 = inlined_call_operand.vmem [shape: f32[16,1], index: 2, kind: output, shape index: {}]
  %s3 = sld [smem:[#allocation0]]
  $region57: #{tpu_custom_call.1} parent=0
    _
  %s5 = ssub.s32 1, %s3
  %s6 = scalar_select 0, %s5, %s3
  $region1: #{tpu_custom_call.1} parent=0
    #allocation7 [shape = 'u8[16384]{0}', space=vmem, size = 0x4000, scoped, tag = 'input window, operand 0']
    #allocation8 [shape = 's32[2]{0}', space=sflag, size = 0x8, scoped, tag = 'scoped memory for tpu_custom_call.1']
    #allocation9 [shape = 'u8[16384]{0}', space=vmem, size = 0x4000, scoped, tag = 'input window, operand 1']
    #allocation10 [shape = 's32[2]{0}', space=sflag, size = 0x8, scoped, tag = 'scoped memory for tpu_custom_call.1']
    %7 = vsyncpa [#allocation8], 0
    %s8 = scalar_lea.sflag [#allocation8], 1
    %9 = vsyncpa %s8, 0
    %10 = vsyncpa [#allocation10], 0
    %s11 = scalar_lea.sflag [#allocation10], 1
    %12 = vsyncpa %s11, 0
    loop: start=0, step=1, limit=10
    $region2: #{tpu_custom_call.1} parent=1 // loop_pre_header
      _
    $region3: #{tpu_custom_call.1} parent=1 // loop_header
      %s14 = sphi 0, %s18
      %p15 = scmp.ge.s32.totalorder %s14, 10
      %s21 = sphi 0, %s33
      %s22 = sphi 0, %s29
      %s23 = sphi 0, %s21
      %s24 = sphi 0, %s22
      %s25 = sphi 0, %s23
      %s26 = sphi 0, %s24
      %s38 = sphi 0, %s40
      %s41 = sphi 0, %s38
      %s42 = sphi 0, %s41
      %s58 = sphi 0, %s42
      %s66 = sphi 0, %s68
      %s69 = sphi 0, %s66
      %s70 = sphi 0, %s69
      %s86 = sphi 0, %s70
      %s92 = sphi 0, %s94
      %s95 = sphi 0, %s92
      %s96 = sphi 0, %s95
      %s112 = sphi 0, %s96
    $region4: #{tpu_custom_call.1} parent=1 // loop_header_branch
      %17 = sbr.rel (%p15) target = $region8
    $region5: #{tpu_custom_call.1} parent=1 // loop_body
      %s19 = ssub.s32 %s14, 1
      %s20 = ssub.s32 %s14, 2
      %s27 = sadd.s32 1, %s22
      %p28 = scmp.ge.s32.totalorder %s27, 4
      %s29 = scalar_select %p28, 0, %s27
      %s30 = sadd.s32 1, %s21
      %s31 = scalar_select %p28, %s30, %s21
      %p32 = scmp.ge.s32.totalorder %s31, 2
      %s33 = scalar_select %p32, 0, %s31
      %s34 = ssub.s32 %s21, %s33
      %s35 = ssub.s32 %s22, %s29
      %s36 = sor.u32 %s34, %s35
      %p37 = scmp.eq.s32.totalorder %s36, 0
      %s39 = sadd.s32 %s38, 1
      %s40 = scalar_select %p37, %s38, %s39
      %p43 = pneg %p37
      %p44 = scmp.eq.s32.totalorder %s14, 7
      %p45 = por %p43, %p44
      %p46 = scmp.ne.s32.totalorder %s38, %s41
      %p47 = scmp.eq.s32.totalorder %s14, 0
      %p48 = por %p46, %p47
      %p49 = scmp.ne.s32.totalorder %s38, %s41
      %p50 = scmp.eq.s32.totalorder %s19, 7
      %p51 = por %p49, %p50
      %p52 = scmp.ne.s32.totalorder %s41, %s42
      %p53 = scmp.eq.s32.totalorder %s19, 0
      %p54 = por %p52, %p53
      %p55 = scmp.ne.s32.totalorder %s41, %s42
      %p56 = scmp.eq.s32.totalorder %s20, 7
      %p57 = por %p55, %p56
      %p59 = scmp.ne.s32.totalorder %s42, %s58
      %p60 = scmp.eq.s32.totalorder %s20, 0
      %p61 = por %p59, %p60
      %s62 = ssub.s32 %s21, %s33
      %s63 = ssub.s32 %s22, %s29
      %s64 = sor.u32 %s62, %s63
      %p65 = scmp.eq.s32.totalorder %s64, 0
      %s67 = sadd.s32 %s66, 1
      %s68 = scalar_select %p65, %s66, %s67
      %p71 = pneg %p65
      %p72 = scmp.eq.s32.totalorder %s14, 7
      %p73 = por %p71, %p72
      %p74 = scmp.ne.s32.totalorder %s66, %s69
      %p75 = scmp.eq.s32.totalorder %s14, 0
      %p76 = por %p74, %p75
      %p77 = scmp.ne.s32.totalorder %s66, %s69
      %p78 = scmp.eq.s32.totalorder %s19, 7
      %p79 = por %p77, %p78
      %p80 = scmp.ne.s32.totalorder %s69, %s70
      %p81 = scmp.eq.s32.totalorder %s19, 0
      %p82 = por %p80, %p81
      %p83 = scmp.ne.s32.totalorder %s69, %s70
      %p84 = scmp.eq.s32.totalorder %s20, 7
      %p85 = por %p83, %p84
      %p87 = scmp.ne.s32.totalorder %s70, %s86
      %p88 = scmp.eq.s32.totalorder %s20, 0
      %p89 = por %p87, %p88
      %s90 = ssub.s32 %s21, %s33
      %p91 = scmp.eq.s32.totalorder %s90, 0
      %s93 = sadd.s32 %s92, 1
      %s94 = scalar_select %p91, %s92, %s93
      %p97 = pneg %p91
      %p98 = scmp.eq.s32.totalorder %s14, 7
      %p99 = por %p97, %p98
      %p100 = scmp.ne.s32.totalorder %s92, %s95
      %p101 = scmp.eq.s32.totalorder %s14, 0
      %p102 = por %p100, %p101
      %p103 = scmp.ne.s32.totalorder %s92, %s95
      %p104 = scmp.eq.s32.totalorder %s19, 7
      %p105 = por %p103, %p104
      %p106 = scmp.ne.s32.totalorder %s95, %s96
      %p107 = scmp.eq.s32.totalorder %s19, 0
      %p108 = por %p106, %p107
      %p109 = scmp.ne.s32.totalorder %s95, %s96
      %p110 = scmp.eq.s32.totalorder %s20, 7
      %p111 = por %p109, %p110
      %p113 = scmp.ne.s32.totalorder %s96, %s112
      %p114 = scmp.eq.s32.totalorder %s20, 0
      %p115 = por %p113, %p114
      %p116 = scmp.le.s32.totalorder 1, %s14
      %p117 = scmp.lt.s32.totalorder %s14, 9
      %p118 = pnand %p116, %p117
      %p119 = pneg %p118
      // Predicated region
      $region9: #{tpu_custom_call.1} parent=5 // pred_check
        _
      $region10: #{tpu_custom_call.1} parent=5 // pred_check_branch
        %121 = sbr.rel (%p118) target = $region12
      $region11: #{tpu_custom_call.1} parent=5 // pred_region
        %s122 = ssub.s32 %s14, 1
      $region12: #{tpu_custom_call.1} parent=5 // pred_fallthru
        _
      %p123 = scmp.lt.s32.totalorder %s14, 8
      // Predicated region
      $region13: #{tpu_custom_call.1} parent=5 // pred_check
        %p124 = pneg %p123
      $region14: #{tpu_custom_call.1} parent=5 // pred_check_branch
        %126 = sbr.rel (%p124) target = $region16
      $region15: #{tpu_custom_call.1} parent=5 // pred_region
        // Predicated region
        $region17: #{tpu_custom_call.1} parent=15 // pred_check
          %p127 = pneg %p48
        $region18: #{tpu_custom_call.1} parent=15 // pred_check_branch
          %129 = sbr.rel (%p127) target = $region20
        $region19: #{tpu_custom_call.1} parent=15 // pred_region
          %s130 = sand.u32 %s38, 1
          %s131 = scalar_lea.sflag [#allocation8], %s130
          %s132 = sand.u32 %s38, 1
          %s133 = smul.addr %s132, 16
          %s134 = scalar_lea.vmem [#allocation7], %s133
          %s135 = smul.u32 2, %s22
          %s137 = ssub.s32 256, 256
          %138 = vsyncadd %s131, %s137
          %s139 = smul.addr %s21, 8
          %s140 = sadd.s32 %s135, %s139
          %s141 = smul.addr %s140, 128
          %s142 = scalar_lea.hbm %s0, %s141
          %s144 = sshll.u32 %s134, 4
          %s145 = int_to_ptr.vmem [resolvable:$true] %s144
          %147 = dma.hbm_to_vmem [thread:$0]  %s142, 256, %s145, %s131
        $region20: #{tpu_custom_call.1} parent=15 // pred_fallthru
          _
        // Predicated region
        $region21: #{tpu_custom_call.1} parent=15 // pred_check
          %p148 = pneg %p76
        $region22: #{tpu_custom_call.1} parent=15 // pred_check_branch
          %150 = sbr.rel (%p148) target = $region24
        $region23: #{tpu_custom_call.1} parent=15 // pred_region
          %s151 = sand.u32 %s66, 1
          %s152 = scalar_lea.sflag [#allocation10], %s151
          %s153 = sand.u32 %s66, 1
          %s154 = smul.addr %s153, 16
          %s155 = scalar_lea.vmem [#allocation9], %s154
          %s156 = smul.u32 2, %s22
          %s158 = ssub.s32 256, 256
          %159 = vsyncadd %s152, %s158
          %s160 = smul.addr %s21, 8
          %s161 = sadd.s32 %s156, %s160
          %s162 = smul.addr %s161, 128
          %s163 = scalar_lea.hbm %s1, %s162
          %s165 = sshll.u32 %s155, 4
          %s166 = int_to_ptr.vmem [resolvable:$true] %s165
          %168 = dma.hbm_to_vmem [thread:$0]  %s163, 256, %s166, %s152
        $region24: #{tpu_custom_call.1} parent=15 // pred_fallthru
          _
      $region16: #{tpu_custom_call.1} parent=5 // pred_fallthru
        _
      %p169 = scmp.le.s32.totalorder 1, %s14
      %p170 = scmp.lt.s32.totalorder %s14, 9
      %p171 = pnand %p169, %p170
      %p172 = pneg %p171
      // Predicated region
      $region25: #{tpu_custom_call.1} parent=5 // pred_check
        _
      $region26: #{tpu_custom_call.1} parent=5 // pred_check_branch
        %174 = sbr.rel (%p171) target = $region28
      $region27: #{tpu_custom_call.1} parent=5 // pred_region
        %s175 = ssub.s32 %s14, 1
        %s176 = sand.u32 %s41, 1
        %s177 = scalar_lea.sflag [#allocation8], %s176
        %s178 = sand.u32 %s41, 1
        %s179 = smul.addr %s178, 16
        %s180 = scalar_lea.vmem [#allocation7], %s179
        // Predicated region
        $region29: #{tpu_custom_call.1} parent=27 // pred_check
          %p181 = pneg %p54
        $region30: #{tpu_custom_call.1} parent=27 // pred_check_branch
          %183 = sbr.rel (%p181) target = $region32
        $region31: #{tpu_custom_call.1} parent=27 // pred_region
          %184 = dma.done %s177, 256
        $region32: #{tpu_custom_call.1} parent=27 // pred_fallthru
          _
        %s185 = sand.u32 %s69, 1
        %s186 = scalar_lea.sflag [#allocation10], %s185
        %s187 = sand.u32 %s69, 1
        %s188 = smul.addr %s187, 16
        %s189 = scalar_lea.vmem [#allocation9], %s188
        // Predicated region
        $region33: #{tpu_custom_call.1} parent=27 // pred_check
          %p190 = pneg %p82
        $region34: #{tpu_custom_call.1} parent=27 // pred_check_branch
          %192 = sbr.rel (%p190) target = $region36
        $region35: #{tpu_custom_call.1} parent=27 // pred_region
          %193 = dma.done %s186, 256
        $region36: #{tpu_custom_call.1} parent=27 // pred_fallthru
          _
        %s194 = sand.u32 %s41, 1
        %s195 = scalar_lea.sflag [#allocation8], %s194
        %s196 = sand.u32 %s41, 1
        %s197 = smul.addr %s196, 16
        %s198 = scalar_lea.vmem [#allocation7], %s197
        %p199 = pneg %p54
        %p200 = pneg %p51
        %s201 = sand.u32 %s69, 1
        %s202 = scalar_lea.sflag [#allocation10], %s201
        %s203 = sand.u32 %s69, 1
        %s204 = smul.addr %s203, 16
        %s205 = scalar_lea.vmem [#allocation9], %s204
        %p206 = pneg %p82
        %p207 = pneg %p79
        %p208 = pneg %p108
        %p209 = pneg %p105
        %p210 = scmp.lt.s32.totalorder %s23, 1
        %s211 = scalar_select %p210, %s23, 1
        %s212 = smul.addr %s211, 8
        %s213 = scalar_lea.vmem %s2, %s212
        %s214 = smul.u32 2, %s24
        %s215 = smul.u32 2, %s24
        %p216 = scmp.lt.s32.totalorder %s23, 1
        %s217 = scalar_select %p216, %s23, 1
        %s218 = smul.addr %s217, 8
        %s219 = scalar_lea.vmem %s2, %s218
        %p220 = scmp.eq.s32.totalorder %s24, 0
        // Predicated region
        $region37: #{tpu_custom_call.1} parent=27 // pred_check
          %p221 = pneg %p220
        $region38: #{tpu_custom_call.1} parent=27 // pred_check_branch
          %223 = sbr.rel (%p221) target = $region40
        $region39: #{tpu_custom_call.1} parent=27 // pred_region
          %vm224 = vcmask 7168
          %225 = vst.msk [vmem:[#allocation2] sm:$0xff] %vm224, 0.0
          %226 = vst.msk [vmem:[#allocation3] sm:$0xff] %vm224, 0.0
          %227 = vst.msk [vmem:[#allocation4] sm:$0xff] %vm224, 0.0
          %228 = vst.msk [vmem:[#allocation5] sm:$0xff] %vm224, 0.0
          %229 = vst.msk [vmem:[#allocation6] sm:$0xff] %vm224, 0.0
        $region40: #{tpu_custom_call.1} parent=27 // pred_fallthru
          _
        %v230 = vld [vmem:[%s180] sm:$0xff]
        %v231 = vld [vmem:[%s180 + $0x8] sm:$0xff]
        %v232 = vld [vmem:[%s189] sm:$0xff]
        %v233 = vld [vmem:[%s189 + $0x8] sm:$0xff]
        %v234 = vld [vmem:[#allocation2] sm:$0xff]
        %v235 = vadd.f32 %v230, %v231
        %236 = vadd.xlane.f32.xlu0 %v235
        %v237 = vpop.xlane.xlu0 %236
        %v238 = vadd.f32 %v234, %v237
        %vm239 = vcmask 7168
        %240 = vst.msk [vmem:[#allocation2] sm:$0xff] %vm239, %v238
        %v241 = vld [vmem:[#allocation3] sm:$0xff]
        %v242 = vadd.f32 %v232, %v233
        %243 = vadd.xlane.f32.xlu0 %v242
        %v244 = vpop.xlane.xlu0 %243
        %v245 = vadd.f32 %v241, %v244
        %246 = vst.msk [vmem:[#allocation3] sm:$0xff] %vm239, %v245
        %v247 = vld [vmem:[#allocation4] sm:$0xff]
        %v248 = vmul.f32 %v230, %v232
        %v249 = vmul.f32 %v231, %v233
        %v250 = vadd.f32 %v248, %v249
        %251 = vadd.xlane.f32.xlu0 %v250
        %v252 = vpop.xlane.xlu0 %251
        %v253 = vadd.f32 %v247, %v252
        %254 = vst.msk [vmem:[#allocation4] sm:$0xff] %vm239, %v253
        %v255 = vld [vmem:[#allocation5] sm:$0xff]
        %v256 = vmul.f32 %v230, %v230
        %v257 = vmul.f32 %v231, %v231
        %v258 = vadd.f32 %v256, %v257
        %259 = vadd.xlane.f32.xlu0 %v258
        %v260 = vpop.xlane.xlu0 %259
        %v261 = vadd.f32 %v255, %v260
        %262 = vst.msk [vmem:[#allocation5] sm:$0xff] %vm239, %v261
        %v263 = vld [vmem:[#allocation6] sm:$0xff]
        %v264 = vmul.f32 %v232, %v232
        %v265 = vmul.f32 %v233, %v233
        %v266 = vadd.f32 %v264, %v265
        %267 = vadd.xlane.f32.xlu0 %v266
        %v268 = vpop.xlane.xlu0 %267
        %v269 = vadd.f32 %v263, %v268
        %270 = vst.msk [vmem:[#allocation6] sm:$0xff] %vm239, %v269
        %p271 = scmp.eq.s32.totalorder %s24, 3
        // Predicated region
        $region41: #{tpu_custom_call.1} parent=27 // pred_check
          %p272 = pneg %p271
        $region42: #{tpu_custom_call.1} parent=27 // pred_check_branch
          %274 = sbr.rel (%p272) target = $region44
        $region43: #{tpu_custom_call.1} parent=27 // pred_region
          %v275 = vld [vmem:[#allocation2] sm:$0xff]
          %v276 = vld [vmem:[#allocation3] sm:$0xff]
          %v277 = vld [vmem:[#allocation4] sm:$0xff]
          %v278 = vmul.f32 %v277, 1024.0
          %v279 = vmul.f32 %v275, %v276
          %v280 = vsub.f32 %v278, %v279
          %v281 = vld [vmem:[#allocation5] sm:$0xff]
          %v282 = vmul.f32 %v281, 1024.0
          %v283 = vmul.f32 %v275, %v275
          %v284 = vsub.f32 %v282, %v283
          %v285 = vld [vmem:[#allocation6] sm:$0xff]
          %v286 = vmul.f32 %v285, 1024.0
          %v287 = vmul.f32 %v276, %v276
          %v288 = vsub.f32 %v286, %v287
          %v289 = vmul.f32 %v284, %v288
          %v290 = vrsqrt.pop %v289
          %v291 = vmul.f32 %v280, %v290
          %v292 = vsub.f32 1.0, %v291
          %293 = vst.msk [vmem:[%s219] sm:$0xff] %vm239, %v292
        $region44: #{tpu_custom_call.1} parent=27 // pred_fallthru
          _
        %p294 = scmp.lt.s32.totalorder %s23, 1
        %s295 = scalar_select %p294, %s23, 1
        %s296 = smul.addr %s295, 8
        %s297 = scalar_lea.vmem %s2, %s296
        // Predicated region
        $region45: #{tpu_custom_call.1} parent=27 // pred_check
          %p298 = pneg %p105
        $region46: #{tpu_custom_call.1} parent=27 // pred_check_branch
          %300 = sbr.rel (%p298) target = $region48
        $region47: #{tpu_custom_call.1} parent=27 // pred_region
          _
        $region48: #{tpu_custom_call.1} parent=27 // pred_fallthru
          _
      $region28: #{tpu_custom_call.1} parent=5 // pred_fallthru
        _
      %p301 = scmp.le.s32.totalorder 2, %s14
      // Predicated region
      $region49: #{tpu_custom_call.1} parent=5 // pred_check
        %p302 = pneg %p301
      $region50: #{tpu_custom_call.1} parent=5 // pred_check_branch
        %304 = sbr.rel (%p302) target = $region52
      $region51: #{tpu_custom_call.1} parent=5 // pred_region
        %s305 = ssub.s32 %s14, 2
        // Predicated region
        $region53: #{tpu_custom_call.1} parent=51 // pred_check
          %p306 = pneg %p111
        $region54: #{tpu_custom_call.1} parent=51 // pred_check_branch
          %308 = sbr.rel (%p306) target = $region56
        $region55: #{tpu_custom_call.1} parent=51 // pred_region
          %p309 = scmp.lt.s32.totalorder %s25, 1
          %s310 = scalar_select %p309, %s25, 1
          %s311 = smul.addr %s310, 8
          %s312 = scalar_lea.vmem %s2, %s311
        $region56: #{tpu_custom_call.1} parent=51 // pred_fallthru
          _
      $region52: #{tpu_custom_call.1} parent=5 // pred_fallthru
        _
    $region6: #{tpu_custom_call.1} parent=1 // loop_footer
      %s18 = sadd.s32 1, %s14
    $region7: #{tpu_custom_call.1} parent=1 // loop_footer_branch
      %13 = sbr.rel target = $region3
    $region8: #{tpu_custom_call.1} parent=1 // loop_exit
      _
    %313 = vsyncpa [#allocation8], 1
    %s314 = scalar_lea.sflag [#allocation8], 1
    %315 = vsyncpa %s314, 1
    %316 = vsyncpa [#allocation10], 1
    %s317 = scalar_lea.sflag [#allocation10], 1
    %318 = vsyncpa %s317, 1

</llo_original>
